<compile_context>
chip_gen: v7x
topology: tpu7x:2x2x1
jax: 0.10.0
libtpu: 0.0.40
codegen_flags: <defaults>
</compile_context>

<pallas_src>
import functools
import math

import jax
import jax.numpy as jnp
from jax.experimental import pallas as pl
from jax.experimental.pallas import tpu as pltpu


def _round_up(x, m):
    return ((x + m - 1) // m) * m


def _lcm(a, b):
    return a * b // math.gcd(a, b)


def _consis_reg_mse_kernel(a_i_ref, a_t_ref, sqr_ref, sqc_ref,
                           lab_i_ref, lab_j_ref, valid_ref, out_ref,
                           g_acc, sum_acc, cnt_acc, *, mask_cols, single_k):
    j = pl.program_id(1)
    k = pl.program_id(2)
    nj = pl.num_programs(1)
    nk = pl.num_programs(2)

    @pl.when(jnp.logical_and(j == 0, k == 0))
    def _init_rows():
        sum_acc[...] = jnp.zeros_like(sum_acc)
        cnt_acc[...] = jnp.zeros_like(cnt_acc)

    def _epilogue(g):
        # Pairwise squared distances: ||a_i||^2 + ||a_j||^2 - 2 <a_i, a_j>.
        s = jnp.maximum(sqr_ref[...] + sqc_ref[...] - 2.0 * g, 0.0)
        same = lab_i_ref[...] == lab_j_ref[...]            # (TM,1)==(1,TN)->(TM,TN)
        if mask_cols:
            same = jnp.logical_and(same, valid_ref[...] != 0)   # drop padded cols
        sum_acc[...] += jnp.sum(jnp.where(same, s, 0.0), axis=-1, keepdims=True)
        cnt_acc[...] += jnp.sum(same.astype(jnp.float32), axis=-1, keepdims=True)

    if single_k:
        # Whole feature dim in one chunk: skip the Gram scratch round-trip.
        g = jnp.dot(a_i_ref[...], a_t_ref[...],
                    preferred_element_type=jnp.float32)
        _epilogue(g)
    else:
        @pl.when(k == 0)
        def _init_gram():
            g_acc[...] = jnp.zeros_like(g_acc)

        g_acc[...] += jnp.dot(a_i_ref[...], a_t_ref[...],
                              preferred_element_type=jnp.float32)

        @pl.when(k == nk - 1)
        def _do_epilogue():
            _epilogue(g_acc[...])

    @pl.when(jnp.logical_and(k == nk - 1, j == nj - 1))
    def _finalize():
        # Real rows always have count >= 1 (self match); the clamp only protects
        # padded rows (discarded by the wrapper) from producing inf/NaN.
        cnt = jnp.maximum(cnt_acc[...], 1.0)
        out_ref[...] = sum_acc[...] / cnt


def consis_reg_mse(representations, targets, *, gram_in_bf16=True,
                   block_m=None, block_n=None, block_k=None):
    """Pallas implementation of Consis_Reg(metric='mse').forward."""
    A = representations.reshape(representations.shape[0], -1)
    N, D = A.shape

    A32 = A.astype(jnp.float32)
    if gram_in_bf16 or A.dtype == jnp.bfloat16:
        A_op = A32.astype(jnp.bfloat16)       # MXU operands in bf16
    else:
        A_op = A32
    op_bytes = A_op.dtype.itemsize

    # ---- tile selection -----------------------------------------------------
    if block_m is not None:
        tm = block_m
        tn = block_n if block_n is not None else block_m
        n_pad = _round_up(N, _lcm(tm, tn))
    elif N <= 256:
        n_pad = max(_round_up(N, 16), 16)
        tm = tn = n_pad
    elif N <= 1024:
        tm = tn = 256
        n_pad = _round_up(N, 256)
    else:
        # Large-N regime: bigger row tile halves A^T re-stream HBM traffic.
        tm, tn = 512, 256
        n_pad = _round_up(N, 512)

    if block_k is not None:
        tk = block_k
        d_pad = _round_up(D, tk)
    elif D <= 1024:
        tk = D
        d_pad = D
    else:
        tk = 512
        d_pad = _round_up(D, 512)

    # ---- padding & operand prep --------------------------------------------
    if n_pad != N or d_pad != D:
        A_op = jnp.pad(A_op, ((0, n_pad - N), (0, d_pad - D)))
    A_T = A_op.T                                           # (d_pad, n_pad), one transpose

    # Squared norms from the *operand* values (in f32) so the Gram identity
    # cancels cleanly on the diagonal even when operands are bf16.
    sq = jnp.sum(A_op.astype(jnp.float32) ** 2, axis=-1, keepdims=True)   # (n_pad, 1)
    sq_row = sq
    sq_col = sq.reshape(1, n_pad)

    if jnp.issubdtype(targets.dtype, jnp.integer):
        lab = targets.astype(jnp.int32)                    # exact integer compare
    else:
        lab = targets.astype(jnp.float32)                  # mirrors torch .float() targets
    if n_pad != N:
        lab = jnp.pad(lab, (0, n_pad - N))
    lab_i = lab.reshape(n_pad, 1)
    lab_j = lab.reshape(1, n_pad)

    # Precomputed column-validity row (replaces the per-tile iota+compare).
    valid = (jnp.arange(n_pad, dtype=jnp.int32) < N).astype(jnp.int32).reshape(1, n_pad)

    grid = (n_pad // tm, n_pad // tn, d_pad // tk)
    single_k = (d_pad // tk == 1)
    mask_cols = (n_pad != N)

    kernel = functools.partial(_consis_reg_mse_kernel,
                               mask_cols=mask_cols, single_k=single_k)

    g_scratch_shape = (8, 128) if single_k else (tm, tn)   # dummy when unused

    cost = pl.CostEstimate(
        flops=2 * n_pad * n_pad * d_pad,
        transcendentals=0,
        bytes_accessed=int((n_pad // tm + 1) * n_pad * d_pad * op_bytes
                           + 6 * n_pad * 4),
    )

    per_row = pl.pallas_call(
        kernel,
        out_shape=jax.ShapeDtypeStruct((n_pad, 1), jnp.float32),
        grid=grid,
        in_specs=[
            pl.BlockSpec((tm, tk), lambda i, j, k: (i, k)),   # A row/feature block
            pl.BlockSpec((tk, tn), lambda i, j, k: (k, j)),   # A^T feature/col block
            pl.BlockSpec((tm, 1), lambda i, j, k: (i, 0)),    # ||a_i||^2
            pl.BlockSpec((1, tn), lambda i, j, k: (0, j)),    # ||a_j||^2
            pl.BlockSpec((tm, 1), lambda i, j, k: (i, 0)),    # labels (rows)
            pl.BlockSpec((1, tn), lambda i, j, k: (0, j)),    # labels (cols)
            pl.BlockSpec((1, tn), lambda i, j, k: (0, j)),    # column validity
        ],
        out_specs=pl.BlockSpec((tm, 1), lambda i, j, k: (i, 0)),
        scratch_shapes=[pltpu.VMEM(g_scratch_shape, jnp.float32),  # Gram accumulator
                        pltpu.VMEM((tm, 1), jnp.float32),          # masked row sums
                        pltpu.VMEM((tm, 1), jnp.float32)],         # same-label counts
        compiler_params=pltpu.CompilerParams(
            dimension_semantics=("parallel", "arbitrary", "arbitrary"),
            vmem_limit_bytes=48 * 1024 * 1024),
        cost_estimate=cost,
    )(A_op, A_T, sq_row, sq_col, lab_i, lab_j, valid)

    # Tiny final reduction over valid rows (padded rows discarded).
    return jnp.sum(per_row[:N, 0])


def _reference_mse(representations, targets):
    """Pure-JAX reference mirroring the PyTorch code path."""
    A = representations.reshape(representations.shape[0], -1).astype(jnp.float32)
    L = targets
    mse = (A[:, None, :] - A[None, :, :]) ** 2
    S = mse.sum(axis=2)
    L_hat = (L[None, :] == L[:, None]).astype(jnp.float32)
    mm = L_hat @ S
    diag = jnp.diagonal(mm)
    return jnp.sum(diag / L_hat.sum(axis=-1))


if __name__ == "__main__":
    key = jax.random.PRNGKey(0)
    k1, k2, k3, k4, k5, k6, k7, k8 = jax.random.split(key, 8)

    # 1) Small case, float targets (as in `torch.tensor(L).float()`), exact f32 path.
    N, D = 8, 32
    reps = jax.random.normal(k1, (N, D), dtype=jnp.float32)
    tgts = jax.random.randint(k2, (N,), 0, 3).astype(jnp.float32)
    ref = jax.block_until_ready(_reference_mse(reps, tgts))
    res = jax.block_until_ready(consis_reg_mse(reps, tgts, gram_in_bf16=False))
    assert jnp.allclose(res, ref, rtol=1e-4, atol=1e-4), (res, ref)

    # 1b) Same case through the default bf16-Gram fast path (looser tolerance).
    res_bf = jax.block_until_ready(consis_reg_mse(reps, tgts))
    assert jnp.allclose(res_bf, ref, rtol=2e-2, atol=1e-2), (res_bf, ref)

    # 2) Multi-block tiled path: padding, column masking, int32 labels, bf16 Gram.
    N2, D2 = 300, 160
    reps2 = jax.random.normal(k3, (N2, D2), dtype=jnp.float32)
    tgts2 = jax.random.randint(k4, (N2,), 0, 5)
    ref2 = jax.block_until_ready(_reference_mse(reps2, tgts2))
    res2 = jax.block_until_ready(consis_reg_mse(reps2, tgts2))
    assert jnp.allclose(res2, ref2, rtol=2e-2, atol=1e-2), (res2, ref2)

    # 3) Feature-chunked (3rd grid axis) path: D padded to multiple of 512,
    #    Gram accumulated across k chunks.  Exact f32 + bf16 variants.
    N3, D3 = 32, 1200
    reps3 = jax.random.normal(k5, (N3, D3), dtype=jnp.float32)
    tgts3 = jax.random.randint(k6, (N3,), 0, 4)
    ref3 = jax.block_until_ready(_reference_mse(reps3, tgts3))
    res3_f32 = jax.block_until_ready(
        consis_reg_mse(reps3, tgts3, gram_in_bf16=False, block_k=512))
    assert jnp.allclose(res3_f32, ref3, rtol=1e-4, atol=1e-2), (res3_f32, ref3)
    res3_bf = jax.block_until_ready(consis_reg_mse(reps3, tgts3, block_k=512))
    assert jnp.allclose(res3_bf, ref3, rtol=2e-2, atol=1e-1), (res3_bf, ref3)

    # 4) Rectangular tile path (tm != tn, as used for large N) via override:
    #    exercises two column blocks per row block + row/column padding.
    N4, D4 = 288, 96
    reps4 = jax.random.normal(k7, (N4, D4), dtype=jnp.float32)
    tgts4 = jax.random.randint(k8, (N4,), 0, 6)
    ref4 = jax.block_until_ready(_reference_mse(reps4, tgts4))
    res4 = jax.block_until_ready(
        consis_reg_mse(reps4, tgts4, block_m=512, block_n=256))
    assert jnp.allclose(res4, ref4, rtol=2e-2, atol=1e-2), (res4, ref4)

    print("KERNEL_OK")
</pallas_src>

<mosaic_0001>
module attributes {stable_mosaic.version = 11 : i64} {
  func.func @_consis_reg_mse_kernel(%arg0: i32, %arg1: i32, %arg2: i32, %arg3: memref<16x32xf32, #tpu.memory_space<vmem>>, %arg4: memref<32x16xf32, #tpu.memory_space<vmem>>, %arg5: memref<16x1xf32, #tpu.memory_space<vmem>>, %arg6: memref<1x16xf32, #tpu.memory_space<vmem>>, %arg7: memref<16x1xf32, #tpu.memory_space<vmem>>, %arg8: memref<1x16xf32, #tpu.memory_space<vmem>>, %arg9: memref<1x16xi32, #tpu.memory_space<vmem>>, %arg10: memref<16x1xf32, #tpu.memory_space<vmem>>, %arg11: memref<8x128xf32, #tpu.memory_space<vmem>>, %arg12: memref<16x1xf32, #tpu.memory_space<vmem>>, %arg13: memref<16x1xf32, #tpu.memory_space<vmem>>) attributes {dimension_semantics = [#tpu.dimension_semantics<parallel>, #tpu.dimension_semantics<arbitrary>, #tpu.dimension_semantics<arbitrary>], iteration_bounds = array<i64: 1, 1, 1>, scalar_prefetch = 0 : i64, scratch_operands = 3 : i64, tpu.core_type = #tpu.core_type<tc>, window_params = [{transform_indices = @transform_0, window_bounds = array<i64: 16, 32>}, {transform_indices = @transform_1, window_bounds = array<i64: 32, 16>}, {transform_indices = @transform_2, window_bounds = array<i64: 16, 1>}, {transform_indices = @transform_3, window_bounds = array<i64: 1, 16>}, {transform_indices = @transform_4, window_bounds = array<i64: 16, 1>}, {transform_indices = @transform_5, window_bounds = array<i64: 1, 16>}, {transform_indices = @transform_6, window_bounds = array<i64: 1, 16>}, {transform_indices = @transform_7, window_bounds = array<i64: 16, 1>}]} {
    %c0_i32 = arith.constant 0 : i32
    %0 = arith.cmpi eq, %arg1, %c0_i32 : i32
    %c0_i32_0 = arith.constant 0 : i32
    %1 = arith.cmpi eq, %arg2, %c0_i32_0 : i32
    %2 = arith.andi %0, %1 : i1
    %3 = arith.extui %2 : i1 to i32
    %c0_i32_1 = arith.constant 0 : i32
    %4 = arith.cmpi ne, %3, %c0_i32_1 : i32
    scf.if %4 {
      %cst_32 = arith.constant 0.000000e+00 : f32
      %47 = vector.broadcast %cst_32 : f32 to vector<16x1xf32>
      %c0_33 = arith.constant 0 : index
      %c0_34 = arith.constant 0 : index
      %48 = vector.load %arg12[%c0_33, %c0_34] : memref<16x1xf32, #tpu.memory_space<vmem>>, vector<16x1xf32>
      tpu.vector_store %arg12[%c0_33, %c0_34], %47 {strides = array<i32>} : memref<16x1xf32, #tpu.memory_space<vmem>>, vector<16x1xf32>,
      %cst_35 = arith.constant 0.000000e+00 : f32
      %49 = vector.broadcast %cst_35 : f32 to vector<16x1xf32>
      %c0_36 = arith.constant 0 : index
      %c0_37 = arith.constant 0 : index
      %50 = vector.load %arg13[%c0_36, %c0_37] : memref<16x1xf32, #tpu.memory_space<vmem>>, vector<16x1xf32>
      tpu.vector_store %arg13[%c0_36, %c0_37], %49 {strides = array<i32>} : memref<16x1xf32, #tpu.memory_space<vmem>>, vector<16x1xf32>,
    } else {
    }
    %c0 = arith.constant 0 : index
    %c0_2 = arith.constant 0 : index
    %5 = vector.load %arg3[%c0, %c0_2] : memref<16x32xf32, #tpu.memory_space<vmem>>, vector<16x32xf32>
    %c0_3 = arith.constant 0 : index
    %c0_4 = arith.constant 0 : index
    %6 = vector.load %arg4[%c0_3, %c0_4] : memref<32x16xf32, #tpu.memory_space<vmem>>, vector<32x16xf32>
    %cst = arith.constant dense<0.000000e+00> : vector<16x16xf32>
    %7 = tpu.matmul %5, %6, %cst {dimension_numbers = #tpu.dot_dimension_numbers<[1], [0], [0], [1], [0, 0, 1, 1], [], []>} : vector<16x32xf32>, vector<32x16xf32>, vector<16x16xf32> -> vector<16x16xf32>
    %c0_5 = arith.constant 0 : index
    %c0_6 = arith.constant 0 : index
    %8 = vector.load %arg5[%c0_5, %c0_6] : memref<16x1xf32, #tpu.memory_space<vmem>>, vector<16x1xf32>
    %c0_7 = arith.constant 0 : index
    %c0_8 = arith.constant 0 : index
    %9 = vector.load %arg6[%c0_7, %c0_8] : memref<1x16xf32, #tpu.memory_space<vmem>>, vector<1x16xf32>
    %10 = vector.broadcast %8 : vector<16x1xf32> to vector<16x16xf32>
    %11 = vector.broadcast %9 : vector<1x16xf32> to vector<16x16xf32>
    %12 = arith.addf %10, %11 : vector<16x16xf32>
    %cst_9 = arith.constant 2.000000e+00 : f32
    %13 = vector.broadcast %cst_9 : f32 to vector<16x16xf32>
    %14 = arith.mulf %13, %7 : vector<16x16xf32>
    %15 = arith.subf %12, %14 : vector<16x16xf32>
    %cst_10 = arith.constant 0.000000e+00 : f32
    %16 = vector.broadcast %cst_10 : f32 to vector<16x16xf32>
    %17 = arith.maximumf %15, %16 : vector<16x16xf32>
    %c0_11 = arith.constant 0 : index
    %c0_12 = arith.constant 0 : index
    %18 = vector.load %arg7[%c0_11, %c0_12] : memref<16x1xf32, #tpu.memory_space<vmem>>, vector<16x1xf32>
    %c0_13 = arith.constant 0 : index
    %c0_14 = arith.constant 0 : index
    %19 = vector.load %arg8[%c0_13, %c0_14] : memref<1x16xf32, #tpu.memory_space<vmem>>, vector<1x16xf32>
    %20 = vector.broadcast %18 : vector<16x1xf32> to vector<16x16xf32>
    %21 = vector.broadcast %19 : vector<1x16xf32> to vector<16x16xf32>
    %22 = arith.cmpf oeq, %20, %21 : vector<16x16xf32>
    %c0_15 = arith.constant 0 : index
    %c0_16 = arith.constant 0 : index
    %23 = vector.load %arg9[%c0_15, %c0_16] : memref<1x16xi32, #tpu.memory_space<vmem>>, vector<1x16xi32>
    %c0_i32_17 = arith.constant 0 : i32
    %24 = vector.broadcast %c0_i32_17 : i32 to vector<1x16xi32>
    %25 = arith.cmpi ne, %23, %24 : vector<1x16xi32>
    %26 = vector.broadcast %25 : vector<1x16xi1> to vector<16x16xi1>
    %27 = arith.andi %22, %26 : vector<16x16xi1>
    %c0_18 = arith.constant 0 : index
    %c0_19 = arith.constant 0 : index
    %28 = vector.load %arg12[%c0_18, %c0_19] : memref<16x1xf32, #tpu.memory_space<vmem>>, vector<16x1xf32>
    %cst_20 = arith.constant 0.000000e+00 : f32
    %29 = vector.broadcast %cst_20 : f32 to vector<16x16xf32>
    %30 = arith.select %27, %17, %29 : vector<16x16xi1>, vector<16x16xf32>
    %cst_21 = arith.constant dense<0.000000e+00> : vector<16xf32>
    %31 = vector.multi_reduction <add>, %30, %cst_21 [1] : vector<16x16xf32> to vector<16xf32>
    %32 = vector.shape_cast %31 : vector<16xf32> to vector<16x1xf32>
    %33 = arith.addf %28, %32 : vector<16x1xf32>
    %c0_22 = arith.constant 0 : index
    %c0_23 = arith.constant 0 : index
    %34 = vector.load %arg12[%c0_22, %c0_23] : memref<16x1xf32, #tpu.memory_space<vmem>>, vector<16x1xf32>
    tpu.vector_store %arg12[%c0_22, %c0_23], %33 {strides = array<i32>} : memref<16x1xf32, #tpu.memory_space<vmem>>, vector<16x1xf32>,
    %c0_24 = arith.constant 0 : index
    %c0_25 = arith.constant 0 : index
    %35 = vector.load %arg13[%c0_24, %c0_25] : memref<16x1xf32, #tpu.memory_space<vmem>>, vector<16x1xf32>
    %36 = arith.extui %27 : vector<16x16xi1> to vector<16x16xi32>
    %37 = arith.sitofp %36 : vector<16x16xi32> to vector<16x16xf32>
    %cst_26 = arith.constant dense<0.000000e+00> : vector<16xf32>
    %38 = vector.multi_reduction <add>, %37, %cst_26 [1] : vector<16x16xf32> to vector<16xf32>
    %39 = vector.shape_cast %38 : vector<16xf32> to vector<16x1xf32>
    %40 = arith.addf %35, %39 : vector<16x1xf32>
    %c0_27 = arith.constant 0 : index
    %c0_28 = arith.constant 0 : index
    %41 = vector.load %arg13[%c0_27, %c0_28] : memref<16x1xf32, #tpu.memory_space<vmem>>, vector<16x1xf32>
    tpu.vector_store %arg13[%c0_27, %c0_28], %40 {strides = array<i32>} : memref<16x1xf32, #tpu.memory_space<vmem>>, vector<16x1xf32>,
    %c0_i32_29 = arith.constant 0 : i32
    %42 = arith.cmpi eq, %arg2, %c0_i32_29 : i32
    %c0_i32_30 = arith.constant 0 : i32
    %43 = arith.cmpi eq, %arg1, %c0_i32_30 : i32
    %44 = arith.andi %42, %43 : i1
    %45 = arith.extui %44 : i1 to i32
    %c0_i32_31 = arith.constant 0 : i32
    %46 = arith.cmpi ne, %45, %c0_i32_31 : i32
    scf.if %46 {
      %c0_32 = arith.constant 0 : index
      %c0_33 = arith.constant 0 : index
      %47 = vector.load %arg13[%c0_32, %c0_33] : memref<16x1xf32, #tpu.memory_space<vmem>>, vector<16x1xf32>
      %cst_34 = arith.constant 1.000000e+00 : f32
      %48 = vector.broadcast %cst_34 : f32 to vector<16x1xf32>
      %49 = arith.maximumf %47, %48 : vector<16x1xf32>
      %c0_35 = arith.constant 0 : index
      %c0_36 = arith.constant 0 : index
      %50 = vector.load %arg12[%c0_35, %c0_36] : memref<16x1xf32, #tpu.memory_space<vmem>>, vector<16x1xf32>
      %51 = arith.divf %50, %49 : vector<16x1xf32>
      %c0_37 = arith.constant 0 : index
      %c0_38 = arith.constant 0 : index
      %52 = vector.load %arg10[%c0_37, %c0_38] : memref<16x1xf32, #tpu.memory_space<vmem>>, vector<16x1xf32>
      tpu.vector_store %arg10[%c0_37, %c0_38], %51 {strides = array<i32>} : memref<16x1xf32, #tpu.memory_space<vmem>>, vector<16x1xf32>,
    } else {
    }
    return
  }
  func.func @transform_0(%arg0: i32, %arg1: i32, %arg2: i32) -> (i32, i32) {
    %c0_i32 = arith.constant 0 : i32
    return %arg0, %arg2 : i32, i32
  }
  func.func @transform_1(%arg0: i32, %arg1: i32, %arg2: i32) -> (i32, i32) {
    %c0_i32 = arith.constant 0 : i32
    return %arg2, %arg1 : i32, i32
  }
  func.func @transform_2(%arg0: i32, %arg1: i32, %arg2: i32) -> (i32, i32) {
    %c0_i32 = arith.constant 0 : i32
    %c0_i32_0 = arith.constant 0 : i32
    return %arg0, %c0_i32 : i32, i32
  }
  func.func @transform_3(%arg0: i32, %arg1: i32, %arg2: i32) -> (i32, i32) {
    %c0_i32 = arith.constant 0 : i32
    %c0_i32_0 = arith.constant 0 : i32
    return %c0_i32, %arg1 : i32, i32
  }
  func.func @transform_4(%arg0: i32, %arg1: i32, %arg2: i32) -> (i32, i32) {
    %c0_i32 = arith.constant 0 : i32
    %c0_i32_0 = arith.constant 0 : i32
    return %arg0, %c0_i32 : i32, i32
  }
  func.func @transform_5(%arg0: i32, %arg1: i32, %arg2: i32) -> (i32, i32) {
    %c0_i32 = arith.constant 0 : i32
    %c0_i32_0 = arith.constant 0 : i32
    return %c0_i32, %arg1 : i32, i32
  }
  func.func @transform_6(%arg0: i32, %arg1: i32, %arg2: i32) -> (i32, i32) {
    %c0_i32 = arith.constant 0 : i32
    %c0_i32_0 = arith.constant 0 : i32
    return %c0_i32, %arg1 : i32, i32
  }
  func.func @transform_7(%arg0: i32, %arg1: i32, %arg2: i32) -> (i32, i32) {
    %c0_i32 = arith.constant 0 : i32
    %c0_i32_0 = arith.constant 0 : i32
    return %arg0, %c0_i32 : i32, i32
  }
}

</mosaic_0001>

<llo_original>
// kernel: tpu_custom_call.1
$region0: #{tpu_custom_call.1}
  #allocation0 [shape = 'u32[]', space=smem, size = 0x4, offset = 0x4, fixed_abs, tag = 'smem constant byte address 0x4 - core index']
  #allocation1 [shape = 'u32[144,128]{1,0:T(1,128)}', space=vmem, size = 0x12000, scoped, tag = 'internal scratch']
  #allocation2 [shape = 'f32[8,128]{1,0:T(8,128)}', space=vmem, size = 0x1000, scoped, tag = 'scratch operand']
  #allocation3 [shape = 'f32[16,1]{1,0:T(8,128)}', space=vmem, size = 0x2000, scoped, tag = 'scratch operand']
  #allocation4 [shape = 'f32[16,1]{1,0:T(8,128)}', space=vmem, size = 0x2000, scoped, tag = 'scratch operand']
  %s0 = inlined_call_operand.vmem [shape: f32[16,32], index: 0, kind: input, shape index: {}]
  %s1 = inlined_call_operand.vmem [shape: f32[32,16], index: 1, kind: input, shape index: {}]
  %s2 = inlined_call_operand.vmem [shape: f32[16,1], index: 2, kind: input, shape index: {}]
  %s3 = inlined_call_operand.vmem [shape: f32[1,16], index: 3, kind: input, shape index: {}]
  %s4 = inlined_call_operand.vmem [shape: f32[16,1], index: 4, kind: input, shape index: {}]
  %s5 = inlined_call_operand.vmem [shape: f32[1,16], index: 5, kind: input, shape index: {}]
  %s6 = inlined_call_operand.vmem [shape: s32[1,16], index: 6, kind: input, shape index: {}]
  %s7 = inlined_call_operand.vmem [shape: f32[16,1], index: 7, kind: output, shape index: {}]
  %s8 = sld [smem:[#allocation0]]
  $region46: #{tpu_custom_call.1} parent=0
    _
  %s10 = ssub.s32 1, %s8
  %s11 = scalar_select 0, %s10, %s8
  // Predicated region
  $region2: #{tpu_custom_call.1} parent=0 // pred_check
    _
  $region3: #{tpu_custom_call.1} parent=0 // pred_check_branch
    %13 = sbr.rel (0) target = $region5
  $region4: #{tpu_custom_call.1} parent=0 // pred_region
    _
  $region5: #{tpu_custom_call.1} parent=0 // pred_fallthru
    _
  // Predicated region
  $region6: #{tpu_custom_call.1} parent=0 // pred_check
    _
  $region7: #{tpu_custom_call.1} parent=0 // pred_check_branch
    %15 = sbr.rel (0) target = $region9
  $region8: #{tpu_custom_call.1} parent=0 // pred_region
    _
  $region9: #{tpu_custom_call.1} parent=0 // pred_fallthru
    _
  // Predicated region
  $region10: #{tpu_custom_call.1} parent=0 // pred_check
    _
  $region11: #{tpu_custom_call.1} parent=0 // pred_check_branch
    %17 = sbr.rel (0) target = $region13
  $region12: #{tpu_custom_call.1} parent=0 // pred_region
    _
  $region13: #{tpu_custom_call.1} parent=0 // pred_fallthru
    _
  // Predicated region
  $region14: #{tpu_custom_call.1} parent=0 // pred_check
    _
  $region15: #{tpu_custom_call.1} parent=0 // pred_check_branch
    %19 = sbr.rel (0) target = $region17
  $region16: #{tpu_custom_call.1} parent=0 // pred_region
    _
  $region17: #{tpu_custom_call.1} parent=0 // pred_fallthru
    _
  // Predicated region
  $region18: #{tpu_custom_call.1} parent=0 // pred_check
    _
  $region19: #{tpu_custom_call.1} parent=0 // pred_check_branch
    %21 = sbr.rel (0) target = $region21
  $region20: #{tpu_custom_call.1} parent=0 // pred_region
    _
  $region21: #{tpu_custom_call.1} parent=0 // pred_fallthru
    _
  // Predicated region
  $region22: #{tpu_custom_call.1} parent=0 // pred_check
    _
  $region23: #{tpu_custom_call.1} parent=0 // pred_check_branch
    %23 = sbr.rel (0) target = $region25
  $region24: #{tpu_custom_call.1} parent=0 // pred_region
    _
  $region25: #{tpu_custom_call.1} parent=0 // pred_fallthru
    _
  // Predicated region
  $region26: #{tpu_custom_call.1} parent=0 // pred_check
    _
  $region27: #{tpu_custom_call.1} parent=0 // pred_check_branch
    %25 = sbr.rel (0) target = $region29
  $region28: #{tpu_custom_call.1} parent=0 // pred_region
    _
  $region29: #{tpu_custom_call.1} parent=0 // pred_fallthru
    _
  %p26 = scmp.eq.s32.totalorder 0, 0
  %p27 = scmp.eq.s32.totalorder 0, 0
  %p28 = pnand %p26, %p27
  %p29 = pneg %p28
  // Predicated region
  $region30: #{tpu_custom_call.1} parent=0 // pred_check
    _
  $region31: #{tpu_custom_call.1} parent=0 // pred_check_branch
    %31 = sbr.rel (%p28) target = $region33
  $region32: #{tpu_custom_call.1} parent=0 // pred_region
    %vm32 = vcmask 7168
    %33 = vst.msk [vmem:[#allocation3] sm:$0xff] %vm32, 0.0
    %34 = vst.msk [vmem:[#allocation3 + $0x8] sm:$0xff] %vm32, 0.0
    %35 = vst.msk [vmem:[#allocation4] sm:$0xff] %vm32, 0.0
    %36 = vst.msk [vmem:[#allocation4 + $0x8] sm:$0xff] %vm32, 0.0
  $region33: #{tpu_custom_call.1} parent=0 // pred_fallthru
    _
  %v37 = vld [vmem:[%s0] sm:$0xff]
  %v38 = vld [vmem:[%s0 + $0x8] sm:$0xff]
  %v39 = vld [vmem:[%s1] sm:$0xff]
  %v40 = vld [vmem:[%s1 + $0x8] sm:$0xff]
  %v41 = vld [vmem:[%s1 + $0x10] sm:$0xff]
  %v42 = vld [vmem:[%s1 + $0x18] sm:$0xff]
  %vm43 = vcmask 261120
  %v45 = vsel %vm43, %v37, 0
  %v48 = vsel %vm43, %v38, 0
  %50 = vmatprep.subr.mxu0 0.0
  %51 = vmatpush1.msra.mxu0 %v39
  %52 = vmatprep.subr.mxu0 0.0
  %53 = vmatpush1.msra.mxu0 %v40
  %54 = vmatprep.subr.mxu0 0.0
  %55 = vmatpush1.msra.mxu0 %v41
  %56 = vmatprep.subr.mxu0 0.0
  %57 = vmatpush1.msra.mxu0 %v42
  %58 = vmatprep.subr.mxu0 0.0
  %59 = vmatpush1.msra.mxu0 0.0
  %60 = vmatprep.subr.mxu0 0.0
  %61 = vmatpush1.msra.mxu0 0.0
  %62 = vmatprep.subr.mxu0 0.0
  %63 = vmatpush1.msra.mxu0 0.0
  %64 = vmatprep.subr.mxu0 0.0
  %65 = vmatpush1.msra.mxu0 0.0
  %66 = vmatprep.subr.mxu0 0.0
  %67 = vmatpush1.msra.mxu0 0.0
  %68 = vmatprep.subr.mxu0 0.0
  %69 = vmatpush1.msra.mxu0 0.0
  %70 = vmatprep.subr.mxu0 0.0
  %71 = vmatpush1.msra.mxu0 0.0
  %72 = vmatprep.subr.mxu0 0.0
  %73 = vmatpush1.msra.mxu0 0.0
  %74 = vmatprep.subr.mxu0 0.0
  %75 = vmatpush1.msra.mxu0 0.0
  %76 = vmatprep.subr.mxu0 0.0
  %77 = vmatpush1.msra.mxu0 0.0
  %78 = vmatprep.subr.mxu0 0.0
  %79 = vmatpush1.msra.mxu0 0.0
  %80 = vmatprep.subr.mxu0 0.0
  %81 = vmatpush1.msra.mxu0 0.0
  %82 = vmatprep.subr.mxu0 0.0
  %83 = vmatpush1.msra.mxu0 0.0
  %84 = vmatprep.subr.mxu0 0.0
  %85 = vmatpush1.msra.mxu0 0.0
  %86 = vmatprep.subr.mxu0 0.0
  %87 = vmatpush1.msra.mxu0 0.0
  %88 = vmatprep.subr.mxu0 0.0
  %89 = vmatpush1.msra.mxu0 0.0
  %90 = vmatprep.subr.mxu0 0.0
  %91 = vmatpush1.msra.mxu0 0.0
  %92 = vmatprep.subr.mxu0 0.0
  %93 = vmatpush1.msra.mxu0 0.0
  %94 = vmatprep.subr.mxu0 0.0
  %95 = vmatpush1.msra.mxu0 0.0
  %96 = vmatprep.subr.mxu0 0.0
  %97 = vmatpush1.msra.mxu0 0.0
  %98 = vmatprep.subr.mxu0 0.0
  %99 = vmatpush1.msra.mxu0 0.0
  %100 = vmatprep.subr.mxu0 0.0
  %101 = vmatpush1.msra.mxu0 0.0
  %102 = vmatprep.subr.mxu0 0.0
  %103 = vmatpush1.msra.mxu0 0.0
  %104 = vmatprep.subr.mxu0 0.0
  %105 = vmatpush1.msra.mxu0 0.0
  %106 = vmatprep.subr.mxu0 0.0
  %107 = vmatpush1.msra.mxu0 0.0
  %108 = vmatprep.subr.mxu0 0.0
  %109 = vmatpush1.msra.mxu0 0.0
  %110 = vmatprep.subr.mxu0 0.0
  %111 = vmatpush1.msra.mxu0 0.0
  %112 = vmatprep.subr.mxu0 0.0
  %113 = vmatpush1.msra.mxu0 0.0
  %114 = vmatprep.mubr.f32.mxu0 0.0
  %115 = vmatmul.mubr.f32.gmra.mrb[0].mxu0 %v45
  %v116 = vpop.f32.mrb[0].mxu0
  %v117 = vadd.f32 0.0, %v116
  %v118 = vpop.f32.mrb[0].mxu0
  %119 = vmatprep.mubr.f32.mxu0 0.0
  %120 = vmatmul.mubr.f32.gmra.mrb[0].mxu0 %v48
  %v121 = vpop.f32.mrb[0].mxu0
  %v122 = vadd.f32 0.0, %v121
  %v123 = vpop.f32.mrb[0].mxu0
  %124 = vdwg.mxu0
  %v125 = vld [vmem:[%s2] sm:$0xff]
  %v126 = vld [vmem:[%s2 + $0x8] sm:$0xff]
  %v127 = vld [vmem:[%s3] sm:$0x1]
  %129 = vset.pattern.permute.xlu0 0
  %130 = vperm.xlu0 %129, %v125
  %v131 = vpop.permute.xlu0 %130
  %134 = vset.pattern.permute.xlu0 0
  %135 = vperm.xlu0 %134, %v126
  %v136 = vpop.permute.xlu0 %135
  %v139 = vlaneseq
  %v140 = vshrl.u32 %v139, 7
  %v141 = vsub.s32 0, %v140
  %v142 = vrot.slane %v127, %v141
  %v144 = vadd.f32 %v131, %v142
  %v145 = vadd.f32 %v136, %v142
  %v146 = vmul.f32 %v117, 2.0
  %v147 = vmul.f32 %v122, 2.0
  %v148 = vsub.f32 %v144, %v146
  %v149 = vsub.f32 %v145, %v147
  %v150 = vmax.f32 %v148, 0.0
  %v151 = vmax.f32 %v149, 0.0
  %v152 = vld [vmem:[%s4] sm:$0xff]
  %v153 = vld [vmem:[%s4 + $0x8] sm:$0xff]
  %v154 = vld [vmem:[%s5] sm:$0x1]
  %156 = vset.pattern.permute.xlu0 0
  %157 = vperm.xlu0 %156, %v152
  %v158 = vpop.permute.xlu0 %157
  %161 = vset.pattern.permute.xlu0 0
  %162 = vperm.xlu0 %161, %v153
  %v163 = vpop.permute.xlu0 %162
  %v166 = vlaneseq
  %v167 = vshrl.u32 %v166, 7
  %v168 = vsub.s32 0, %v167
  %v169 = vrot.slane %v154, %v168
  %vm171 = vcmp.eq.f32.partialorder %v158, %v169
  %vm172 = vcmp.eq.f32.partialorder %v163, %v169
  %v173 = vld [vmem:[%s6] sm:$0x1]
  %vm174 = vcmp.ne.s32.totalorder %v173, 0
  %v175 = vsel %vm174, 1, 0
  %v176 = vlaneseq
  %v177 = vshrl.u32 %v176, 7
  %v178 = vsub.s32 0, %v177
  %v179 = vrot.slane %v175, %v178
  %vm180 = vcmp.eq.s32.totalorder %v179, 1
  %vm181 = vmand %vm171, %vm180
  %vm182 = vmand %vm172, %vm180
  %v183 = vld [vmem:[#allocation3] sm:$0xff]
  %v184 = vld [vmem:[#allocation3 + $0x8] sm:$0xff]
  %v185 = vsel %vm181, %v150, 0.0
  %v186 = vsel %vm182, %v151, 0.0
  %vm187 = vcmask 130048
  %v188 = vsel %vm187, %v185, 0.0
  %189 = vadd.xlane.f32.xlu0 %v188
  %v190 = vpop.xlane.xlu0 %189
  %v191 = vsel %vm187, %v186, 0.0
  %192 = vadd.xlane.f32.xlu0 %v191
  %v193 = vpop.xlane.xlu0 %192
  %v194 = vadd.f32 %v183, %v190
  %v195 = vadd.f32 %v184, %v193
  %vm196 = vcmask 7168
  %197 = vst.msk [vmem:[#allocation3] sm:$0xff] %vm196, %v194
  %198 = vst.msk [vmem:[#allocation3 + $0x8] sm:$0xff] %vm196, %v195
  %v199 = vld [vmem:[#allocation4] sm:$0xff]
  %v200 = vld [vmem:[#allocation4 + $0x8] sm:$0xff]
  %v201 = vsel %vm181, 1, 0
  %v202 = vsel %vm182, 1, 0
  %v203 = vcvt.s32.f32 %v201
  %v204 = vcvt.s32.f32 %v202
  %v205 = vsel %vm187, %v203, 0.0
  %206 = vadd.xlane.f32.xlu0 %v205
  %v207 = vpop.xlane.xlu0 %206
  %v208 = vsel %vm187, %v204, 0.0
  %209 = vadd.xlane.f32.xlu0 %v208
  %v210 = vpop.xlane.xlu0 %209
  %v211 = vadd.f32 %v199, %v207
  %v212 = vadd.f32 %v200, %v210
  %213 = vst.msk [vmem:[#allocation4] sm:$0xff] %vm196, %v211
  %214 = vst.msk [vmem:[#allocation4 + $0x8] sm:$0xff] %vm196, %v212
  // Predicated region
  $region34: #{tpu_custom_call.1} parent=0 // pred_check
    _
  $region35: #{tpu_custom_call.1} parent=0 // pred_check_branch
    %216 = sbr.rel (%p28) target = $region37
  $region36: #{tpu_custom_call.1} parent=0 // pred_region
    %v217 = vld [vmem:[#allocation4] sm:$0xff]
    %v218 = vld [vmem:[#allocation4 + $0x8] sm:$0xff]
    %v219 = vmax.f32 %v217, 1.0
    %v220 = vmax.f32 %v218, 1.0
    %v221 = vld [vmem:[#allocation3] sm:$0xff]
    %v222 = vld [vmem:[#allocation3 + $0x8] sm:$0xff]
    %v223 = vrcp.pop %v219
    %v224 = vmul.f32 %v221, %v223
    %v225 = vrcp.pop %v220
    %v226 = vmul.f32 %v222, %v225
    %227 = vst.msk [vmem:[%s7] sm:$0xff] %vm196, %v224
    %228 = vst.msk [vmem:[%s7 + $0x8] sm:$0xff] %vm196, %v226
  $region37: #{tpu_custom_call.1} parent=0 // pred_fallthru
    _
  // Predicated region
  $region38: #{tpu_custom_call.1} parent=0 // pred_check
    _
  $region39: #{tpu_custom_call.1} parent=0 // pred_check_branch
    %230 = sbr.rel (0) target = $region41
  $region40: #{tpu_custom_call.1} parent=0 // pred_region
    _
  $region41: #{tpu_custom_call.1} parent=0 // pred_fallthru
    _
  // Predicated region
  $region42: #{tpu_custom_call.1} parent=0 // pred_check
    _
  $region43: #{tpu_custom_call.1} parent=0 // pred_check_branch
    %232 = sbr.rel (0) target = $region45
  $region44: #{tpu_custom_call.1} parent=0 // pred_region
    _
  $region45: #{tpu_custom_call.1} parent=0 // pred_fallthru
    _

</llo_original>
